<compile_context>
chip_gen: v5e
topology: v5e:2x2
jax: 0.10.0
libtpu: 0.0.40
codegen_flags: <defaults>
</compile_context>

<pallas_src>
import jax
import jax.numpy as jnp
from jax import lax
from jax.experimental import pallas as pl
from jax.experimental.pallas import tpu as pltpu


# ---------------------------------------------------------------------------
# Counter-based PRNG (Threefry-2x32, 20 rounds) in plain int32 vector ops.
# ---------------------------------------------------------------------------
_ROTATIONS = ((13, 15, 26, 6), (17, 29, 16, 24))


def _rotl32(x, s):
    """Rotate-left on int32 (logical right shift emulated via shift + mask)."""
    return (x << s) | ((x >> (32 - s)) & ((1 << s) - 1))


def _threefry2x32(c0, c1, k0, k1):
    """Threefry-2x32, 20 rounds, wrapping int32 arithmetic. Returns word 0."""
    k2 = k0 ^ k1 ^ 0x1BD11BDA
    ks = (k0, k1, k2)
    x0 = c0 + k0
    x1 = c1 + k1
    for g in range(5):                      # 5 groups of 4 rounds = 20 rounds
        for s in _ROTATIONS[g % 2]:
            x0 = x0 + x1
            x1 = _rotl32(x1, s)
            x1 = x1 ^ x0
        x0 = x0 + ks[(g + 1) % 3]
        x1 = x1 + ks[(g + 2) % 3] + (g + 1)
    return x0


def _uniform_block(seed, tb, L):
    """U[0,1) float32 of shape (tb, L), keyed on seed + absolute (row, col)."""
    row0 = pl.program_id(0) * tb
    rows = lax.broadcasted_iota(jnp.int32, (tb, L), 0) + row0
    cols = lax.broadcasted_iota(jnp.int32, (tb, L), 1)
    bits = _threefry2x32(rows, cols, seed, 0x243F6A88)
    # 24 random bits -> [0, 1)
    return ((bits >> 8) & 0xFFFFFF).astype(jnp.float32) * jnp.float32(1.0 / (1 << 24))


# ---------------------------------------------------------------------------
# Kernel
# ---------------------------------------------------------------------------
def _make_kernel(p, pad_token, min_false, with_rand):
    p = float(p)

    def kernel(*refs):
        seed_ref = refs[0]
        idx = 1
        if min_false > 0:
            ids_ref = refs[idx]
            idx += 1
        mask_ref = refs[idx]
        idx += 1
        rand_ref = refs[idx] if with_rand else None

        tb, L = mask_ref.shape
        rand = _uniform_block(seed_ref[0], tb, L)
        if with_rand:
            rand_ref[...] = rand

        if min_false > 0:
            ids = ids_ref[...]
            rand2 = jnp.where(ids == pad_token, jnp.float32(-1.0), rand)
            cols = lax.broadcasted_iota(jnp.int32, (tb, L), 1)
            # Iterative top-`min_false` extraction (exact equivalent of
            # argsort[:, -min_false:] + scatter 1.01): per step, take the row
            # max of rand2, select its first occurrence, set rand there to
            # 1.01 and knock it out of rand2. O(min_false * L) work, only
            # (tb, L) tensors live.
            for _ in range(min_false):
                row_max = jnp.max(rand2, axis=-1, keepdims=True)
                at_max = rand2 >= row_max
                first = jnp.min(jnp.where(at_max, cols, jnp.int32(L)),
                                axis=-1, keepdims=True)
                sel = cols == first                       # exactly one / row
                rand = jnp.where(sel, jnp.float32(1.01), rand)
                rand2 = jnp.where(sel, jnp.float32(-2.0), rand2)

        mask_ref[...] = (rand < jnp.float32(p)).astype(jnp.int8)

    return kernel


# ---------------------------------------------------------------------------
# Block sizing (generation-aware) and wrapper
# ---------------------------------------------------------------------------
def _vmem_budget_bytes():
    """Per-block working-set budget; shrinks automatically on v7x (64 MiB)."""
    try:
        info = pltpu.get_tpu_info()
        return int(min(8 << 20, info.vmem_capacity_bytes // 16))
    except Exception:
        return 4 << 20


def _pick_block_rows(B, L, min_false):
    budget = _vmem_budget_bytes()
    if min_false > 0:
        per_row = L * 12          # ids(i32) in + mask(i8) out + few f32 temps
    else:
        per_row = max(L, 1)       # int8 mask out is the only HBM stream
    tb = max(8, (budget // per_row) // 8 * 8)
    if B >= 16:                   # keep >= 2 grid steps for v7x megacore
        half = max(8, ((B + 1) // 2 + 7) // 8 * 8)
        tb = min(tb, half)
    if B >= 32:                   # int8 output prefers sublane multiples of 32
        tb = max(32, tb // 32 * 32)
    return int(min(tb, B))


def random_mask_maker(input_ids, *, p, pad_token=None, min_false=0, seed=0,
                      block_rows=None, return_rand=False):
    """input_ids: [B, L] int32 -> mask [B, L] bool (and rand if return_rand)."""
    if min_false:
        assert pad_token is not None
    B, L = input_ids.shape
    tb = block_rows or _pick_block_rows(B, L, min_false)
    tb = int(min(tb, B))
    grid = (pl.cdiv(B, tb),)

    kernel = _make_kernel(float(p), pad_token, int(min_false), return_rand)
    seed_arr = jnp.asarray([seed], dtype=jnp.int32)

    # TODO(synk): for min_false==0 and L < 128, flatten (B, L) wrapper-side to
    # a 128-wide lane-dense slab to avoid masked partial stores.
    args = [seed_arr]
    in_specs = []
    if min_false > 0:
        in_specs.append(pl.BlockSpec((tb, L), lambda i, _s: (i, 0)))
        args.append(input_ids)

    out_shapes = [jax.ShapeDtypeStruct((B, L), jnp.int8)]
    out_specs = [pl.BlockSpec((tb, L), lambda i, _s: (i, 0))]
    if return_rand:
        out_shapes.append(jax.ShapeDtypeStruct((B, L), jnp.float32))
        out_specs.append(pl.BlockSpec((tb, L), lambda i, _s: (i, 0)))

    outs = pl.pallas_call(
        kernel,
        out_shape=tuple(out_shapes),
        grid_spec=pltpu.PrefetchScalarGridSpec(
            num_scalar_prefetch=1,                 # seed lives in SMEM
            grid=grid,
            in_specs=in_specs,
            out_specs=tuple(out_specs),
        ),
        compiler_params=pltpu.CompilerParams(
            dimension_semantics=("parallel",)),
    )(*args)

    mask = outs[0].astype(jnp.bool_)
    if return_rand:
        return mask, outs[1]
    return mask


def _reference_from_rand(rand, ids, p, pad_token, min_false):
    """Pure-JAX replication of the PyTorch forward, given the same rand draws."""
    if min_false > 0:
        rand2 = jnp.where(ids == pad_token, -1.0, rand)
        fill_idx = jnp.argsort(rand2, axis=1)[:, -min_false:]
        rows = jnp.arange(rand.shape[0])[:, None]
        rand = rand.at[rows, fill_idx].set(1.01)
    return rand < p


if __name__ == "__main__":
    key = jax.random.PRNGKey(0)
    k1, k2 = jax.random.split(key)

    # --- min_false path: B=2, L=16, pad_token=0, 3 pads per row ---------------
    B, L = 2, 16
    p, pad_token, min_false = 0.35, 0, 2
    ids = jax.random.randint(k1, (B, L), 1, 100, dtype=jnp.int32)
    ids = ids.at[:, -3:].set(pad_token)

    mask, rand = random_mask_maker(ids, p=p, pad_token=pad_token,
                                   min_false=min_false, seed=0, return_rand=True)
    mask = jax.block_until_ready(mask)
    assert mask.shape == (B, L) and mask.dtype == jnp.bool_
    ref = _reference_from_rand(rand, ids, p, pad_token, min_false)
    assert bool(jnp.array_equal(mask, ref)), "mismatch vs argsort/scatter reference"
    assert bool(jnp.all(jnp.sum(~mask, axis=1) >= min_false)), "min_false violated"

    # --- min_false == 0 fast path: no ids read, int8 mask ---------------------
    B2, L2, p2 = 8, 512, 0.3
    ids2 = jax.random.randint(k2, (B2, L2), 1, 100, dtype=jnp.int32)
    mask2, rand2 = random_mask_maker(ids2, p=p2, seed=7, return_rand=True)
    mask2 = jax.block_until_ready(mask2)
    assert bool(jnp.array_equal(mask2, rand2 < p2))
    frac = float(jnp.mean(mask2.astype(jnp.float32)))
    assert 0.2 < frac < 0.4, f"mask rate {frac} far from p={p2}"

    # Production-style call (no debug rand output) must give the same mask.
    mask3 = random_mask_maker(ids2, p=p2, seed=7)
    mask3 = jax.block_until_ready(mask3)
    assert bool(jnp.array_equal(mask3, mask2))

    print("KERNEL_OK")
</pallas_src>

<mosaic_0001>
module attributes {stable_mosaic.version = 11 : i64} {
  func.func @kernel(%arg0: i32, %arg1: memref<1xi32, #tpu.memory_space<smem>>, %arg2: memref<2x16xi32, #tpu.memory_space<vmem>>, %arg3: memref<2x16xi8, #tpu.memory_space<vmem>>, %arg4: memref<2x16xf32, #tpu.memory_space<vmem>>) attributes {dimension_semantics = [#tpu.dimension_semantics<parallel>], iteration_bounds = array<i64: 1>, scalar_prefetch = 1 : i64, scratch_operands = 0 : i64, tpu.core_type = #tpu.core_type<tc>, window_params = [{transform_indices = @transform_0, window_bounds = array<i64: 2, 16>}, {transform_indices = @transform_1, window_bounds = array<i64: 2, 16>}, {transform_indices = @transform_2, window_bounds = array<i64: 2, 16>}]} {
    %c0 = arith.constant 0 : index
    %0 = memref.load %arg1[%c0] : memref<1xi32, #tpu.memory_space<smem>>
    %c2_i32 = arith.constant 2 : i32
    %1 = arith.muli %arg0, %c2_i32 : i32
    %2 = tpu.iota {dimensions = array<i32: 0>} : vector<2x16xi32>
    %3 = vector.broadcast %1 : i32 to vector<2x16xi32>
    %4 = arith.addi %2, %3 : vector<2x16xi32>
    %5 = tpu.iota {dimensions = array<i32: 1>} : vector<2x16xi32>
    %c608135816_i32 = arith.constant 608135816 : i32
    %6 = arith.xori %0, %c608135816_i32 : i32
    %c466688986_i32 = arith.constant 466688986 : i32
    %7 = arith.xori %6, %c466688986_i32 : i32
    %8 = vector.broadcast %0 : i32 to vector<2x16xi32>
    %9 = arith.addi %4, %8 : vector<2x16xi32>
    %c608135816_i32_0 = arith.constant 608135816 : i32
    %10 = vector.broadcast %c608135816_i32_0 : i32 to vector<2x16xi32>
    %11 = arith.addi %5, %10 : vector<2x16xi32>
    %12 = arith.addi %9, %11 : vector<2x16xi32>
    %c13_i32 = arith.constant 13 : i32
    %13 = vector.broadcast %c13_i32 : i32 to vector<2x16xi32>
    %14 = arith.shli %11, %13 : vector<2x16xi32>
    %c19_i32 = arith.constant 19 : i32
    %15 = vector.broadcast %c19_i32 : i32 to vector<2x16xi32>
    %16 = arith.shrsi %11, %15 : vector<2x16xi32>
    %c8191_i32 = arith.constant 8191 : i32
    %17 = vector.broadcast %c8191_i32 : i32 to vector<2x16xi32>
    %18 = arith.andi %16, %17 : vector<2x16xi32>
    %19 = arith.ori %14, %18 : vector<2x16xi32>
    %20 = arith.xori %19, %12 : vector<2x16xi32>
    %21 = arith.addi %12, %20 : vector<2x16xi32>
    %c15_i32 = arith.constant 15 : i32
    %22 = vector.broadcast %c15_i32 : i32 to vector<2x16xi32>
    %23 = arith.shli %20, %22 : vector<2x16xi32>
    %c17_i32 = arith.constant 17 : i32
    %24 = vector.broadcast %c17_i32 : i32 to vector<2x16xi32>
    %25 = arith.shrsi %20, %24 : vector<2x16xi32>
    %c32767_i32 = arith.constant 32767 : i32
    %26 = vector.broadcast %c32767_i32 : i32 to vector<2x16xi32>
    %27 = arith.andi %25, %26 : vector<2x16xi32>
    %28 = arith.ori %23, %27 : vector<2x16xi32>
    %29 = arith.xori %28, %21 : vector<2x16xi32>
    %30 = arith.addi %21, %29 : vector<2x16xi32>
    %c26_i32 = arith.constant 26 : i32
    %31 = vector.broadcast %c26_i32 : i32 to vector<2x16xi32>
    %32 = arith.shli %29, %31 : vector<2x16xi32>
    %c6_i32 = arith.constant 6 : i32
    %33 = vector.broadcast %c6_i32 : i32 to vector<2x16xi32>
    %34 = arith.shrsi %29, %33 : vector<2x16xi32>
    %c67108863_i32 = arith.constant 67108863 : i32
    %35 = vector.broadcast %c67108863_i32 : i32 to vector<2x16xi32>
    %36 = arith.andi %34, %35 : vector<2x16xi32>
    %37 = arith.ori %32, %36 : vector<2x16xi32>
    %38 = arith.xori %37, %30 : vector<2x16xi32>
    %39 = arith.addi %30, %38 : vector<2x16xi32>
    %c6_i32_1 = arith.constant 6 : i32
    %40 = vector.broadcast %c6_i32_1 : i32 to vector<2x16xi32>
    %41 = arith.shli %38, %40 : vector<2x16xi32>
    %c26_i32_2 = arith.constant 26 : i32
    %42 = vector.broadcast %c26_i32_2 : i32 to vector<2x16xi32>
    %43 = arith.shrsi %38, %42 : vector<2x16xi32>
    %c63_i32 = arith.constant 63 : i32
    %44 = vector.broadcast %c63_i32 : i32 to vector<2x16xi32>
    %45 = arith.andi %43, %44 : vector<2x16xi32>
    %46 = arith.ori %41, %45 : vector<2x16xi32>
    %47 = arith.xori %46, %39 : vector<2x16xi32>
    %c608135816_i32_3 = arith.constant 608135816 : i32
    %48 = vector.broadcast %c608135816_i32_3 : i32 to vector<2x16xi32>
    %49 = arith.addi %39, %48 : vector<2x16xi32>
    %50 = vector.broadcast %7 : i32 to vector<2x16xi32>
    %51 = arith.addi %47, %50 : vector<2x16xi32>
    %c1_i32 = arith.constant 1 : i32
    %52 = vector.broadcast %c1_i32 : i32 to vector<2x16xi32>
    %53 = arith.addi %51, %52 : vector<2x16xi32>
    %54 = arith.addi %49, %53 : vector<2x16xi32>
    %c17_i32_4 = arith.constant 17 : i32
    %55 = vector.broadcast %c17_i32_4 : i32 to vector<2x16xi32>
    %56 = arith.shli %53, %55 : vector<2x16xi32>
    %c15_i32_5 = arith.constant 15 : i32
    %57 = vector.broadcast %c15_i32_5 : i32 to vector<2x16xi32>
    %58 = arith.shrsi %53, %57 : vector<2x16xi32>
    %c131071_i32 = arith.constant 131071 : i32
    %59 = vector.broadcast %c131071_i32 : i32 to vector<2x16xi32>
    %60 = arith.andi %58, %59 : vector<2x16xi32>
    %61 = arith.ori %56, %60 : vector<2x16xi32>
    %62 = arith.xori %61, %54 : vector<2x16xi32>
    %63 = arith.addi %54, %62 : vector<2x16xi32>
    %c29_i32 = arith.constant 29 : i32
    %64 = vector.broadcast %c29_i32 : i32 to vector<2x16xi32>
    %65 = arith.shli %62, %64 : vector<2x16xi32>
    %c3_i32 = arith.constant 3 : i32
    %66 = vector.broadcast %c3_i32 : i32 to vector<2x16xi32>
    %67 = arith.shrsi %62, %66 : vector<2x16xi32>
    %c536870911_i32 = arith.constant 536870911 : i32
    %68 = vector.broadcast %c536870911_i32 : i32 to vector<2x16xi32>
    %69 = arith.andi %67, %68 : vector<2x16xi32>
    %70 = arith.ori %65, %69 : vector<2x16xi32>
    %71 = arith.xori %70, %63 : vector<2x16xi32>
    %72 = arith.addi %63, %71 : vector<2x16xi32>
    %c16_i32 = arith.constant 16 : i32
    %73 = vector.broadcast %c16_i32 : i32 to vector<2x16xi32>
    %74 = arith.shli %71, %73 : vector<2x16xi32>
    %c16_i32_6 = arith.constant 16 : i32
    %75 = vector.broadcast %c16_i32_6 : i32 to vector<2x16xi32>
    %76 = arith.shrsi %71, %75 : vector<2x16xi32>
    %c65535_i32 = arith.constant 65535 : i32
    %77 = vector.broadcast %c65535_i32 : i32 to vector<2x16xi32>
    %78 = arith.andi %76, %77 : vector<2x16xi32>
    %79 = arith.ori %74, %78 : vector<2x16xi32>
    %80 = arith.xori %79, %72 : vector<2x16xi32>
    %81 = arith.addi %72, %80 : vector<2x16xi32>
    %c24_i32 = arith.constant 24 : i32
    %82 = vector.broadcast %c24_i32 : i32 to vector<2x16xi32>
    %83 = arith.shli %80, %82 : vector<2x16xi32>
    %c8_i32 = arith.constant 8 : i32
    %84 = vector.broadcast %c8_i32 : i32 to vector<2x16xi32>
    %85 = arith.shrsi %80, %84 : vector<2x16xi32>
    %c16777215_i32 = arith.constant 16777215 : i32
    %86 = vector.broadcast %c16777215_i32 : i32 to vector<2x16xi32>
    %87 = arith.andi %85, %86 : vector<2x16xi32>
    %88 = arith.ori %83, %87 : vector<2x16xi32>
    %89 = arith.xori %88, %81 : vector<2x16xi32>
    %90 = vector.broadcast %7 : i32 to vector<2x16xi32>
    %91 = arith.addi %81, %90 : vector<2x16xi32>
    %92 = vector.broadcast %0 : i32 to vector<2x16xi32>
    %93 = arith.addi %89, %92 : vector<2x16xi32>
    %c2_i32_7 = arith.constant 2 : i32
    %94 = vector.broadcast %c2_i32_7 : i32 to vector<2x16xi32>
    %95 = arith.addi %93, %94 : vector<2x16xi32>
    %96 = arith.addi %91, %95 : vector<2x16xi32>
    %c13_i32_8 = arith.constant 13 : i32
    %97 = vector.broadcast %c13_i32_8 : i32 to vector<2x16xi32>
    %98 = arith.shli %95, %97 : vector<2x16xi32>
    %c19_i32_9 = arith.constant 19 : i32
    %99 = vector.broadcast %c19_i32_9 : i32 to vector<2x16xi32>
    %100 = arith.shrsi %95, %99 : vector<2x16xi32>
    %c8191_i32_10 = arith.constant 8191 : i32
    %101 = vector.broadcast %c8191_i32_10 : i32 to vector<2x16xi32>
    %102 = arith.andi %100, %101 : vector<2x16xi32>
    %103 = arith.ori %98, %102 : vector<2x16xi32>
    %104 = arith.xori %103, %96 : vector<2x16xi32>
    %105 = arith.addi %96, %104 : vector<2x16xi32>
    %c15_i32_11 = arith.constant 15 : i32
    %106 = vector.broadcast %c15_i32_11 : i32 to vector<2x16xi32>
    %107 = arith.shli %104, %106 : vector<2x16xi32>
    %c17_i32_12 = arith.constant 17 : i32
    %108 = vector.broadcast %c17_i32_12 : i32 to vector<2x16xi32>
    %109 = arith.shrsi %104, %108 : vector<2x16xi32>
    %c32767_i32_13 = arith.constant 32767 : i32
    %110 = vector.broadcast %c32767_i32_13 : i32 to vector<2x16xi32>
    %111 = arith.andi %109, %110 : vector<2x16xi32>
    %112 = arith.ori %107, %111 : vector<2x16xi32>
    %113 = arith.xori %112, %105 : vector<2x16xi32>
    %114 = arith.addi %105, %113 : vector<2x16xi32>
    %c26_i32_14 = arith.constant 26 : i32
    %115 = vector.broadcast %c26_i32_14 : i32 to vector<2x16xi32>
    %116 = arith.shli %113, %115 : vector<2x16xi32>
    %c6_i32_15 = arith.constant 6 : i32
    %117 = vector.broadcast %c6_i32_15 : i32 to vector<2x16xi32>
    %118 = arith.shrsi %113, %117 : vector<2x16xi32>
    %c67108863_i32_16 = arith.constant 67108863 : i32
    %119 = vector.broadcast %c67108863_i32_16 : i32 to vector<2x16xi32>
    %120 = arith.andi %118, %119 : vector<2x16xi32>
    %121 = arith.ori %116, %120 : vector<2x16xi32>
    %122 = arith.xori %121, %114 : vector<2x16xi32>
    %123 = arith.addi %114, %122 : vector<2x16xi32>
    %c6_i32_17 = arith.constant 6 : i32
    %124 = vector.broadcast %c6_i32_17 : i32 to vector<2x16xi32>
    %125 = arith.shli %122, %124 : vector<2x16xi32>
    %c26_i32_18 = arith.constant 26 : i32
    %126 = vector.broadcast %c26_i32_18 : i32 to vector<2x16xi32>
    %127 = arith.shrsi %122, %126 : vector<2x16xi32>
    %c63_i32_19 = arith.constant 63 : i32
    %128 = vector.broadcast %c63_i32_19 : i32 to vector<2x16xi32>
    %129 = arith.andi %127, %128 : vector<2x16xi32>
    %130 = arith.ori %125, %129 : vector<2x16xi32>
    %131 = arith.xori %130, %123 : vector<2x16xi32>
    %132 = vector.broadcast %0 : i32 to vector<2x16xi32>
    %133 = arith.addi %123, %132 : vector<2x16xi32>
    %c608135816_i32_20 = arith.constant 608135816 : i32
    %134 = vector.broadcast %c608135816_i32_20 : i32 to vector<2x16xi32>
    %135 = arith.addi %131, %134 : vector<2x16xi32>
    %c3_i32_21 = arith.constant 3 : i32
    %136 = vector.broadcast %c3_i32_21 : i32 to vector<2x16xi32>
    %137 = arith.addi %135, %136 : vector<2x16xi32>
    %138 = arith.addi %133, %137 : vector<2x16xi32>
    %c17_i32_22 = arith.constant 17 : i32
    %139 = vector.broadcast %c17_i32_22 : i32 to vector<2x16xi32>
    %140 = arith.shli %137, %139 : vector<2x16xi32>
    %c15_i32_23 = arith.constant 15 : i32
    %141 = vector.broadcast %c15_i32_23 : i32 to vector<2x16xi32>
    %142 = arith.shrsi %137, %141 : vector<2x16xi32>
    %c131071_i32_24 = arith.constant 131071 : i32
    %143 = vector.broadcast %c131071_i32_24 : i32 to vector<2x16xi32>
    %144 = arith.andi %142, %143 : vector<2x16xi32>
    %145 = arith.ori %140, %144 : vector<2x16xi32>
    %146 = arith.xori %145, %138 : vector<2x16xi32>
    %147 = arith.addi %138, %146 : vector<2x16xi32>
    %c29_i32_25 = arith.constant 29 : i32
    %148 = vector.broadcast %c29_i32_25 : i32 to vector<2x16xi32>
    %149 = arith.shli %146, %148 : vector<2x16xi32>
    %c3_i32_26 = arith.constant 3 : i32
    %150 = vector.broadcast %c3_i32_26 : i32 to vector<2x16xi32>
    %151 = arith.shrsi %146, %150 : vector<2x16xi32>
    %c536870911_i32_27 = arith.constant 536870911 : i32
    %152 = vector.broadcast %c536870911_i32_27 : i32 to vector<2x16xi32>
    %153 = arith.andi %151, %152 : vector<2x16xi32>
    %154 = arith.ori %149, %153 : vector<2x16xi32>
    %155 = arith.xori %154, %147 : vector<2x16xi32>
    %156 = arith.addi %147, %155 : vector<2x16xi32>
    %c16_i32_28 = arith.constant 16 : i32
    %157 = vector.broadcast %c16_i32_28 : i32 to vector<2x16xi32>
    %158 = arith.shli %155, %157 : vector<2x16xi32>
    %c16_i32_29 = arith.constant 16 : i32
    %159 = vector.broadcast %c16_i32_29 : i32 to vector<2x16xi32>
    %160 = arith.shrsi %155, %159 : vector<2x16xi32>
    %c65535_i32_30 = arith.constant 65535 : i32
    %161 = vector.broadcast %c65535_i32_30 : i32 to vector<2x16xi32>
    %162 = arith.andi %160, %161 : vector<2x16xi32>
    %163 = arith.ori %158, %162 : vector<2x16xi32>
    %164 = arith.xori %163, %156 : vector<2x16xi32>
    %165 = arith.addi %156, %164 : vector<2x16xi32>
    %c24_i32_31 = arith.constant 24 : i32
    %166 = vector.broadcast %c24_i32_31 : i32 to vector<2x16xi32>
    %167 = arith.shli %164, %166 : vector<2x16xi32>
    %c8_i32_32 = arith.constant 8 : i32
    %168 = vector.broadcast %c8_i32_32 : i32 to vector<2x16xi32>
    %169 = arith.shrsi %164, %168 : vector<2x16xi32>
    %c16777215_i32_33 = arith.constant 16777215 : i32
    %170 = vector.broadcast %c16777215_i32_33 : i32 to vector<2x16xi32>
    %171 = arith.andi %169, %170 : vector<2x16xi32>
    %172 = arith.ori %167, %171 : vector<2x16xi32>
    %173 = arith.xori %172, %165 : vector<2x16xi32>
    %c608135816_i32_34 = arith.constant 608135816 : i32
    %174 = vector.broadcast %c608135816_i32_34 : i32 to vector<2x16xi32>
    %175 = arith.addi %165, %174 : vector<2x16xi32>
    %176 = vector.broadcast %7 : i32 to vector<2x16xi32>
    %177 = arith.addi %173, %176 : vector<2x16xi32>
    %c4_i32 = arith.constant 4 : i32
    %178 = vector.broadcast %c4_i32 : i32 to vector<2x16xi32>
    %179 = arith.addi %177, %178 : vector<2x16xi32>
    %180 = arith.addi %175, %179 : vector<2x16xi32>
    %c13_i32_35 = arith.constant 13 : i32
    %181 = vector.broadcast %c13_i32_35 : i32 to vector<2x16xi32>
    %182 = arith.shli %179, %181 : vector<2x16xi32>
    %c19_i32_36 = arith.constant 19 : i32
    %183 = vector.broadcast %c19_i32_36 : i32 to vector<2x16xi32>
    %184 = arith.shrsi %179, %183 : vector<2x16xi32>
    %c8191_i32_37 = arith.constant 8191 : i32
    %185 = vector.broadcast %c8191_i32_37 : i32 to vector<2x16xi32>
    %186 = arith.andi %184, %185 : vector<2x16xi32>
    %187 = arith.ori %182, %186 : vector<2x16xi32>
    %188 = arith.xori %187, %180 : vector<2x16xi32>
    %189 = arith.addi %180, %188 : vector<2x16xi32>
    %c15_i32_38 = arith.constant 15 : i32
    %190 = vector.broadcast %c15_i32_38 : i32 to vector<2x16xi32>
    %191 = arith.shli %188, %190 : vector<2x16xi32>
    %c17_i32_39 = arith.constant 17 : i32
    %192 = vector.broadcast %c17_i32_39 : i32 to vector<2x16xi32>
    %193 = arith.shrsi %188, %192 : vector<2x16xi32>
    %c32767_i32_40 = arith.constant 32767 : i32
    %194 = vector.broadcast %c32767_i32_40 : i32 to vector<2x16xi32>
    %195 = arith.andi %193, %194 : vector<2x16xi32>
    %196 = arith.ori %191, %195 : vector<2x16xi32>
    %197 = arith.xori %196, %189 : vector<2x16xi32>
    %198 = arith.addi %189, %197 : vector<2x16xi32>
    %c26_i32_41 = arith.constant 26 : i32
    %199 = vector.broadcast %c26_i32_41 : i32 to vector<2x16xi32>
    %200 = arith.shli %197, %199 : vector<2x16xi32>
    %c6_i32_42 = arith.constant 6 : i32
    %201 = vector.broadcast %c6_i32_42 : i32 to vector<2x16xi32>
    %202 = arith.shrsi %197, %201 : vector<2x16xi32>
    %c67108863_i32_43 = arith.constant 67108863 : i32
    %203 = vector.broadcast %c67108863_i32_43 : i32 to vector<2x16xi32>
    %204 = arith.andi %202, %203 : vector<2x16xi32>
    %205 = arith.ori %200, %204 : vector<2x16xi32>
    %206 = arith.xori %205, %198 : vector<2x16xi32>
    %207 = arith.addi %198, %206 : vector<2x16xi32>
    %208 = vector.broadcast %7 : i32 to vector<2x16xi32>
    %209 = arith.addi %207, %208 : vector<2x16xi32>
    %c8_i32_44 = arith.constant 8 : i32
    %210 = vector.broadcast %c8_i32_44 : i32 to vector<2x16xi32>
    %211 = arith.shrsi %209, %210 : vector<2x16xi32>
    %c16777215_i32_45 = arith.constant 16777215 : i32
    %212 = vector.broadcast %c16777215_i32_45 : i32 to vector<2x16xi32>
    %213 = arith.andi %211, %212 : vector<2x16xi32>
    %214 = arith.sitofp %213 : vector<2x16xi32> to vector<2x16xf32>
    %cst = arith.constant 5.96046448E-8 : f32
    %215 = vector.broadcast %cst : f32 to vector<2x16xf32>
    %216 = arith.mulf %214, %215 : vector<2x16xf32>
    %c0_46 = arith.constant 0 : index
    %c0_47 = arith.constant 0 : index
    %217 = vector.load %arg4[%c0_46, %c0_47] : memref<2x16xf32, #tpu.memory_space<vmem>>, vector<2x16xf32>
    tpu.vector_store %arg4[%c0_46, %c0_47], %216 {strides = array<i32>} : memref<2x16xf32, #tpu.memory_space<vmem>>, vector<2x16xf32>,
    %c0_48 = arith.constant 0 : index
    %c0_49 = arith.constant 0 : index
    %218 = vector.load %arg2[%c0_48, %c0_49] : memref<2x16xi32, #tpu.memory_space<vmem>>, vector<2x16xi32>
    %c0_i32 = arith.constant 0 : i32
    %219 = vector.broadcast %c0_i32 : i32 to vector<2x16xi32>
    %220 = arith.cmpi eq, %218, %219 : vector<2x16xi32>
    %cst_50 = arith.constant -1.000000e+00 : f32
    %221 = vector.broadcast %cst_50 : f32 to vector<2x16xf32>
    %222 = arith.select %220, %221, %216 : vector<2x16xi1>, vector<2x16xf32>
    %223 = tpu.iota {dimensions = array<i32: 1>} : vector<2x16xi32>
    %cst_51 = arith.constant dense<0xFF800000> : vector<2xf32>
    %224 = vector.multi_reduction <maximumf>, %222, %cst_51 [1] : vector<2x16xf32> to vector<2xf32>
    %225 = vector.shape_cast %224 : vector<2xf32> to vector<2x1xf32>
    %226 = vector.broadcast %225 : vector<2x1xf32> to vector<2x16xf32>
    %227 = arith.cmpf oge, %222, %226 : vector<2x16xf32>
    %c16_i32_52 = arith.constant 16 : i32
    %228 = vector.broadcast %c16_i32_52 : i32 to vector<2x16xi32>
    %229 = arith.select %227, %223, %228 : vector<2x16xi1>, vector<2x16xi32>
    %cst_53 = arith.constant dense<2147483647> : vector<2xi32>
    %230 = vector.multi_reduction <minsi>, %229, %cst_53 [1] : vector<2x16xi32> to vector<2xi32>
    %231 = vector.shape_cast %230 : vector<2xi32> to vector<2x1xi32>
    %232 = vector.broadcast %231 : vector<2x1xi32> to vector<2x16xi32>
    %233 = arith.cmpi eq, %223, %232 : vector<2x16xi32>
    %cst_54 = arith.constant 1.010000e+00 : f32
    %234 = vector.broadcast %cst_54 : f32 to vector<2x16xf32>
    %235 = arith.select %233, %234, %216 : vector<2x16xi1>, vector<2x16xf32>
    %cst_55 = arith.constant -2.000000e+00 : f32
    %236 = vector.broadcast %cst_55 : f32 to vector<2x16xf32>
    %237 = arith.select %233, %236, %222 : vector<2x16xi1>, vector<2x16xf32>
    %cst_56 = arith.constant dense<0xFF800000> : vector<2xf32>
    %238 = vector.multi_reduction <maximumf>, %237, %cst_56 [1] : vector<2x16xf32> to vector<2xf32>
    %239 = vector.shape_cast %238 : vector<2xf32> to vector<2x1xf32>
    %240 = vector.broadcast %239 : vector<2x1xf32> to vector<2x16xf32>
    %241 = arith.cmpf oge, %237, %240 : vector<2x16xf32>
    %c16_i32_57 = arith.constant 16 : i32
    %242 = vector.broadcast %c16_i32_57 : i32 to vector<2x16xi32>
    %243 = arith.select %241, %223, %242 : vector<2x16xi1>, vector<2x16xi32>
    %cst_58 = arith.constant dense<2147483647> : vector<2xi32>
    %244 = vector.multi_reduction <minsi>, %243, %cst_58 [1] : vector<2x16xi32> to vector<2xi32>
    %245 = vector.shape_cast %244 : vector<2xi32> to vector<2x1xi32>
    %246 = vector.broadcast %245 : vector<2x1xi32> to vector<2x16xi32>
    %247 = arith.cmpi eq, %223, %246 : vector<2x16xi32>
    %cst_59 = arith.constant 1.010000e+00 : f32
    %248 = vector.broadcast %cst_59 : f32 to vector<2x16xf32>
    %249 = arith.select %247, %248, %235 : vector<2x16xi1>, vector<2x16xf32>
    %cst_60 = arith.constant 3.500000e-01 : f32
    %250 = vector.broadcast %cst_60 : f32 to vector<2x16xf32>
    %251 = arith.cmpf olt, %249, %250 : vector<2x16xf32>
    %252 = arith.extui %251 : vector<2x16xi1> to vector<2x16xi8>
    %c0_61 = arith.constant 0 : index
    %c0_62 = arith.constant 0 : index
    %253 = vector.load %arg3[%c0_61, %c0_62] : memref<2x16xi8, #tpu.memory_space<vmem>>, vector<2x16xi8>
    tpu.vector_store %arg3[%c0_61, %c0_62], %252 {strides = array<i32>} : memref<2x16xi8, #tpu.memory_space<vmem>>, vector<2x16xi8>,
    return
  }
  func.func @transform_0(%arg0: i32, %arg1: memref<1xi32, #tpu.memory_space<smem>>) -> (i32, i32) {
    %c0_i32 = arith.constant 0 : i32
    %c0_i32_0 = arith.constant 0 : i32
    return %arg0, %c0_i32 : i32, i32
  }
  func.func @transform_1(%arg0: i32, %arg1: memref<1xi32, #tpu.memory_space<smem>>) -> (i32, i32) {
    %c0_i32 = arith.constant 0 : i32
    %c0_i32_0 = arith.constant 0 : i32
    return %arg0, %c0_i32 : i32, i32
  }
  func.func @transform_2(%arg0: i32, %arg1: memref<1xi32, #tpu.memory_space<smem>>) -> (i32, i32) {
    %c0_i32 = arith.constant 0 : i32
    %c0_i32_0 = arith.constant 0 : i32
    return %arg0, %c0_i32 : i32, i32
  }
}

</mosaic_0001>

<llo_original>
// kernel: tpu_custom_call.1
$region0: #{tpu_custom_call.1}
  #allocation0 [shape = 'u32[]', space=smem, size = 0x4, offset = 0x4, fixed_abs, tag = 'smem constant byte address 0x4 - core index']
  #allocation1 [shape = 'u32[72,128]{1,0:T(1,128)}', space=vmem, size = 0x9000, scoped, tag = 'internal scratch']
  #allocation2 [shape = 's32[1]{0}', space=sflag, size = 0x4, scoped, tag = 'scoped memory for tpu_custom_call.1']
  #allocation3 [shape = 's32[1]{0:T(128)S(6)}', space=smem, size = 0x200, scoped, tag = 'prefetched SMEM operand 0']
  %s0 = inlined_call_operand.<no memory space> [shape: s32[1], index: 0, kind: input, shape index: {}]
  %s1 = inlined_call_operand.vmem [shape: s32[2,16], index: 1, kind: input, shape index: {}]
  %s2 = inlined_call_operand.hbm [shape: s8[2,16], index: 2, kind: output, shape index: {0}]
  %s3 = inlined_call_operand.hbm [shape: f32[2,16], index: 3, kind: output, shape index: {1}]
  %4 = xla_tuple %s2, %s3
  %s5 = sld [smem:[#allocation0]]
  $region22: #{tpu_custom_call.1} parent=0
    _
  %s7 = ssub.s32 1, %s5
  %s8 = scalar_select 0, %s7, %s5
  %9 = sst [smem:[#allocation3]] %s0
  $region1: #{tpu_custom_call.1} parent=0
    #allocation4 [shape = 'u8[512]{0}', space=vmem, size = 0x400, scoped, tag = 'output window, operand 0, single buffered']
    #allocation5 [shape = 's32[1]{0}', space=sflag, size = 0x4, scoped, tag = 'scoped memory for tpu_custom_call.1']
    #allocation6 [shape = 'u8[1024]{0}', space=vmem, size = 0x400, scoped, tag = 'output window, operand 1, single buffered']
    #allocation7 [shape = 's32[1]{0}', space=sflag, size = 0x4, scoped, tag = 'scoped memory for tpu_custom_call.1']
    %10 = vsyncpa [#allocation5], 0
    %11 = vsyncpa [#allocation7], 0
    // Predicated region
    $region2: #{tpu_custom_call.1} parent=1 // pred_check
      _
    $region3: #{tpu_custom_call.1} parent=1 // pred_check_branch
      %13 = sbr.rel (0) target = $region5
    $region4: #{tpu_custom_call.1} parent=1 // pred_region
      _
    $region5: #{tpu_custom_call.1} parent=1 // pred_fallthru
      _
    %s16 = sld [smem:[#allocation3]]
    %s17 = smul.u32 0, 2
    %v18 = vlaneseq
    %v19 = vshrl.u32 %v18, 7
    %v20 = vstv %s17
    %v21 = vadd.s32 %v19, %v20
    %v22 = vlaneseq
    %v23 = vand.u32 %v22, 127
    %s24 = sxor.u32 %s16, 608135816
    %s25 = sxor.u32 %s24, 466688986
    %v26 = vstv %s16
    %v27 = vadd.s32 %v21, %v26
    %v28 = vadd.s32 %v23, 608135816
    %v29 = vadd.s32 %v27, %v28
    %v30 = vshll.u32 %v28, 13
    %v31 = vshra.s32 %v28, 19
    %v32 = vand.u32 %v31, 8191
    %v33 = vor.u32 %v30, %v32
    %v34 = vxor.u32 %v33, %v29
    %v35 = vadd.s32 %v29, %v34
    %v36 = vshll.u32 %v34, 15
    %v37 = vshra.s32 %v34, 17
    %v38 = vand.u32 %v37, 32767
    %v39 = vor.u32 %v36, %v38
    %v40 = vxor.u32 %v39, %v35
    %v41 = vadd.s32 %v35, %v40
    %v42 = vshll.u32 %v40, 26
    %v43 = vshra.s32 %v40, 6
    %v44 = vand.u32 %v43, 67108863
    %v45 = vor.u32 %v42, %v44
    %v46 = vxor.u32 %v45, %v41
    %v47 = vadd.s32 %v41, %v46
    %v48 = vshll.u32 %v46, 6
    %v49 = vshra.s32 %v46, 26
    %v50 = vand.u32 %v49, 63
    %v51 = vor.u32 %v48, %v50
    %v52 = vxor.u32 %v51, %v47
    %v53 = vadd.s32 %v47, 608135816
    %v54 = vstv %s25
    %v55 = vadd.s32 %v52, %v54
    %v56 = vadd.s32 %v55, 1
    %v57 = vadd.s32 %v53, %v56
    %v58 = vshll.u32 %v56, 17
    %v59 = vshra.s32 %v56, 15
    %v60 = vand.u32 %v59, 131071
    %v61 = vor.u32 %v58, %v60
    %v62 = vxor.u32 %v61, %v57
    %v63 = vadd.s32 %v57, %v62
    %v64 = vshll.u32 %v62, 29
    %v65 = vshra.s32 %v62, 3
    %v66 = vand.u32 %v65, 536870911
    %v67 = vor.u32 %v64, %v66
    %v68 = vxor.u32 %v67, %v63
    %v69 = vadd.s32 %v63, %v68
    %v70 = vshll.u32 %v68, 16
    %v71 = vshra.s32 %v68, 16
    %v72 = vand.u32 %v71, 65535
    %v73 = vor.u32 %v70, %v72
    %v74 = vxor.u32 %v73, %v69
    %v75 = vadd.s32 %v69, %v74
    %v76 = vshll.u32 %v74, 24
    %v77 = vshra.s32 %v74, 8
    %v78 = vand.u32 %v77, 16777215
    %v79 = vor.u32 %v76, %v78
    %v80 = vxor.u32 %v79, %v75
    %v81 = vadd.s32 %v75, %v54
    %v82 = vadd.s32 %v80, %v26
    %v83 = vadd.s32 %v82, 2
    %v84 = vadd.s32 %v81, %v83
    %v85 = vshll.u32 %v83, 13
    %v86 = vshra.s32 %v83, 19
    %v87 = vand.u32 %v86, 8191
    %v88 = vor.u32 %v85, %v87
    %v89 = vxor.u32 %v88, %v84
    %v90 = vadd.s32 %v84, %v89
    %v91 = vshll.u32 %v89, 15
    %v92 = vshra.s32 %v89, 17
    %v93 = vand.u32 %v92, 32767
    %v94 = vor.u32 %v91, %v93
    %v95 = vxor.u32 %v94, %v90
    %v96 = vadd.s32 %v90, %v95
    %v97 = vshll.u32 %v95, 26
    %v98 = vshra.s32 %v95, 6
    %v99 = vand.u32 %v98, 67108863
    %v100 = vor.u32 %v97, %v99
    %v101 = vxor.u32 %v100, %v96
    %v102 = vadd.s32 %v96, %v101
    %v103 = vshll.u32 %v101, 6
    %v104 = vshra.s32 %v101, 26
    %v105 = vand.u32 %v104, 63
    %v106 = vor.u32 %v103, %v105
    %v107 = vxor.u32 %v106, %v102
    %v108 = vadd.s32 %v102, %v26
    %v109 = vadd.s32 %v107, 608135816
    %v110 = vadd.s32 %v109, 3
    %v111 = vadd.s32 %v108, %v110
    %v112 = vshll.u32 %v110, 17
    %v113 = vshra.s32 %v110, 15
    %v114 = vand.u32 %v113, 131071
    %v115 = vor.u32 %v112, %v114
    %v116 = vxor.u32 %v115, %v111
    %v117 = vadd.s32 %v111, %v116
    %v118 = vshll.u32 %v116, 29
    %v119 = vshra.s32 %v116, 3
    %v120 = vand.u32 %v119, 536870911
    %v121 = vor.u32 %v118, %v120
    %v122 = vxor.u32 %v121, %v117
    %v123 = vadd.s32 %v117, %v122
    %v124 = vshll.u32 %v122, 16
    %v125 = vshra.s32 %v122, 16
    %v126 = vand.u32 %v125, 65535
    %v127 = vor.u32 %v124, %v126
    %v128 = vxor.u32 %v127, %v123
    %v129 = vadd.s32 %v123, %v128
    %v130 = vshll.u32 %v128, 24
    %v131 = vshra.s32 %v128, 8
    %v132 = vand.u32 %v131, 16777215
    %v133 = vor.u32 %v130, %v132
    %v134 = vxor.u32 %v133, %v129
    %v135 = vadd.s32 %v129, 608135816
    %v136 = vadd.s32 %v134, %v54
    %v137 = vadd.s32 %v136, 4
    %v138 = vadd.s32 %v135, %v137
    %v139 = vshll.u32 %v137, 13
    %v140 = vshra.s32 %v137, 19
    %v141 = vand.u32 %v140, 8191
    %v142 = vor.u32 %v139, %v141
    %v143 = vxor.u32 %v142, %v138
    %v144 = vadd.s32 %v138, %v143
    %v145 = vshll.u32 %v143, 15
    %v146 = vshra.s32 %v143, 17
    %v147 = vand.u32 %v146, 32767
    %v148 = vor.u32 %v145, %v147
    %v149 = vxor.u32 %v148, %v144
    %v150 = vadd.s32 %v144, %v149
    %v151 = vshll.u32 %v149, 26
    %v152 = vshra.s32 %v149, 6
    %v153 = vand.u32 %v152, 67108863
    %v154 = vor.u32 %v151, %v153
    %v155 = vxor.u32 %v154, %v150
    %v156 = vadd.s32 %v150, %v155
    %v157 = vadd.s32 %v156, %v54
    %v158 = vshra.s32 %v157, 8
    %v159 = vand.u32 %v158, 16777215
    %v160 = vcvt.s32.f32 %v159
    %v161 = vmul.f32 %v160, 5.9604645e-08
    %vm162 = vcmask 123904
    %163 = vst.msk [vmem:[#allocation6] sm:$0x3] %vm162, %v161
    %v164 = vld [vmem:[%s1] sm:$0x3]
    %vm165 = vcmp.eq.s32.totalorder %v164, 0
    %v166 = vsel %vm165, -1.0, %v161
    %v167 = vsel %vm162, %v166, -inf
    %168 = vmax.xlane.f32.xlu0 %v167
    %v169 = vpop.xlane.xlu0 %168
    %vm170 = vcmp.ge.f32.partialorder %v166, %v169
    %v171 = vsel %vm170, %v23, 16
    %v172 = vsel %vm162, %v171, 2147483647
    %v173 = vand.u32 %v172, 65535
    %v174 = vshra.s32 %v172, 16
    %v175 = vcvt.s32.f32 %v173
    %v176 = vcvt.s32.f32 %v174
    %177 = vmin.xlane.f32.xlu0 %v176
    %v178 = vpop.xlane.xlu0 %177
    %vm179 = vcmp.eq.f32.partialorder %v176, %v178
    %v180 = vsel %vm179, %v175, inf
    %181 = vmin.xlane.f32.xlu0 %v180
    %v182 = vpop.xlane.xlu0 %181
    %v183 = vcvt.f32.s32 %v182
    %v184 = vcvt.f32.s32 %v178
    %v185 = vshll.u32 %v184, 16
    %v186 = vadd.s32 %v185, %v183
    %vm187 = vcmp.eq.s32.totalorder %v23, %v186
    %v188 = vsel %vm187, 1.01, %v161
    %v189 = vsel %vm187, -2.0, %v166
    %v190 = vsel %vm162, %v189, -inf
    %191 = vmax.xlane.f32.xlu0 %v190
    %v192 = vpop.xlane.xlu0 %191
    %vm193 = vcmp.ge.f32.partialorder %v189, %v192
    %v194 = vsel %vm193, %v23, 16
    %v195 = vsel %vm162, %v194, 2147483647
    %v196 = vand.u32 %v195, 65535
    %v197 = vshra.s32 %v195, 16
    %v198 = vcvt.s32.f32 %v196
    %v199 = vcvt.s32.f32 %v197
    %200 = vmin.xlane.f32.xlu0 %v199
    %v201 = vpop.xlane.xlu0 %200
    %vm202 = vcmp.eq.f32.partialorder %v199, %v201
    %v203 = vsel %vm202, %v198, inf
    %204 = vmin.xlane.f32.xlu0 %v203
    %v205 = vpop.xlane.xlu0 %204
    %v206 = vcvt.f32.s32 %v205
    %v207 = vcvt.f32.s32 %v201
    %v208 = vshll.u32 %v207, 16
    %v209 = vadd.s32 %v208, %v206
    %vm210 = vcmp.eq.s32.totalorder %v23, %v209
    %v211 = vsel %vm210, 1.01, %v188
    %vm212 = vcmp.lt.f32.partialorder %v211, 0.35
    %vm213 = vmpackc.low %vm212, %vm212
    %v214 = vsel %vm213, 16711935, 0
    %v215 = vsel %vm213, 16711935, 0
    %v216 = vpack.c.b8 %v215, %v214
    %vm217 = vnez %v216
    %v218 = vsel %vm217, 16843009, 0
    %vm219 = vcmask 122880
    %vm220 = vsmask.f32 256
    %vm221 = vmand %vm219, %vm220
    %v222 = vld [vmem:[#allocation4] sm:$0x1]
    %v223 = vsel %vm221, %v218, %v222
    %224 = vst [vmem:[#allocation4] sm:$0x1] %v223
    // Predicated region
    $region6: #{tpu_custom_call.1} parent=1 // pred_check
      _
    $region7: #{tpu_custom_call.1} parent=1 // pred_check_branch
      %226 = sbr.rel (0) target = $region9
    $region8: #{tpu_custom_call.1} parent=1 // pred_region
      %228 = vsyncadd [#allocation5], 0
      %s230 = sshll.u32 [#allocation4], 4
      %s231 = int_to_ptr.vmem [resolvable:$true] %s230
      %s232 = sshll.u32 %s2, 4
      %s233 = int_to_ptr.hbm [resolvable:$true] %s232
      %235 = dma.vmem_to_hbm [thread:$0]  %s231, 16, %s233, [#allocation5]
    $region9: #{tpu_custom_call.1} parent=1 // pred_fallthru
      _
    // Predicated region
    $region10: #{tpu_custom_call.1} parent=1 // pred_check
      _
    $region11: #{tpu_custom_call.1} parent=1 // pred_check_branch
      %237 = sbr.rel (0) target = $region13
    $region12: #{tpu_custom_call.1} parent=1 // pred_region
      %239 = vsyncadd [#allocation7], 0
      %s241 = sshll.u32 [#allocation6], 4
      %s242 = int_to_ptr.vmem [resolvable:$true] %s241
      %s243 = sshll.u32 %s3, 4
      %s244 = int_to_ptr.hbm [resolvable:$true] %s243
      %246 = dma.vmem_to_hbm [thread:$0]  %s242, 32, %s244, [#allocation7]
    $region13: #{tpu_custom_call.1} parent=1 // pred_fallthru
      _
    // Predicated region
    $region14: #{tpu_custom_call.1} parent=1 // pred_check
      _
    $region15: #{tpu_custom_call.1} parent=1 // pred_check_branch
      %248 = sbr.rel (0) target = $region17
    $region16: #{tpu_custom_call.1} parent=1 // pred_region
      %250 = dma.done [#allocation5], 16
    $region17: #{tpu_custom_call.1} parent=1 // pred_fallthru
      _
    // Predicated region
    $region18: #{tpu_custom_call.1} parent=1 // pred_check
      _
    $region19: #{tpu_custom_call.1} parent=1 // pred_check_branch
      %252 = sbr.rel (0) target = $region21
    $region20: #{tpu_custom_call.1} parent=1 // pred_region
      %254 = dma.done [#allocation7], 32
    $region21: #{tpu_custom_call.1} parent=1 // pred_fallthru
      _
    %255 = vsyncpa [#allocation5], 1
    %256 = vsyncpa [#allocation7], 1

</llo_original>
